<compile_context>
chip_gen: v5e
topology: v5e:2x2
jax: 0.10.0
libtpu: 0.0.40
codegen_flags: <defaults>
</compile_context>

<pallas_src>
import jax
import jax.numpy as jnp
from jax.experimental import pallas as pl
from jax.experimental.pallas import tpu as pltpu

LN_EPS = 1e-5  # torch.nn.LayerNorm default


def _textproj_kernel(x_ref, w_ref, b_ref, gamma_ref, beta_ref, o_ref):
    # x_ref:     (B, E)      full input, resident across the grid
    # w_ref:     (E, TC*D)   weight slab for this step's TC tokens (stream dtype)
    # b_ref:     (1, TC*D)   Linear bias slab (f32)
    # gamma_ref: (1, D)      LayerNorm weight (f32, resident)
    # beta_ref:  (1, D)      LayerNorm bias   (f32, resident)
    # o_ref:     (B, TC*D)   output slab (f32, lane-dense)
    D = gamma_ref.shape[-1]
    TC = o_ref.shape[-1] // D
    inv_d = 1.0 / float(D)

    # Hoisted once per grid step (not per token).
    gamma = gamma_ref[...]
    beta = beta_ref[...]
    x = x_ref[...].astype(w_ref.dtype)  # single small (B, E) convert

    # Per-token matmul + LayerNorm: only a (B, D) slab is live at a time, so
    # nothing spills even at production T*D.  Slices are static, lane-aligned
    # (D is a multiple of 128) views of the refs.
    for t in range(TC):
        lo, hi = t * D, (t + 1) * D
        yt = jnp.dot(x, w_ref[:, lo:hi], preferred_element_type=jnp.float32)
        yt = yt + b_ref[:, lo:hi]
        mean = jnp.sum(yt, axis=-1, keepdims=True) * inv_d
        yc = yt - mean
        var = jnp.sum(yc * yc, axis=-1, keepdims=True) * inv_d  # two-pass, stable
        y_norm = yc * jax.lax.rsqrt(var + LN_EPS)                # rsqrt -> EUP slot
        o_ref[:, lo:hi] = (y_norm * gamma + beta).astype(o_ref.dtype)


def _vmem_capacity_bytes():
    """Physical VMEM of the local TPU; safe (smallest-known) fallback."""
    try:
        cap = int(getattr(pltpu.get_tpu_info(), "vmem_capacity_bytes", 0))
        if cap > 0:
            return cap
    except Exception:
        pass
    return 64 * 1024 * 1024  # v7x size; conservative for v5e/v6e (128 MiB)


def _num_tensorcores():
    """TensorCores per chip (2 on v7x); defaults to 1 if undetectable."""
    try:
        info = pltpu.get_tpu_info()
        for attr in ("num_cores", "num_tensorcores", "core_count", "tensorcore_count"):
            v = getattr(info, attr, None)
            if v:
                return int(v)
    except Exception:
        pass
    try:
        kind = jax.devices()[0].device_kind.lower()
        if "v7" in kind or "7x" in kind:
            return 2
    except Exception:
        pass
    return 1


def _tokens_per_step(B, E, D, T, *, w_itemsize, budget_bytes, min_steps):
    """Largest divisor of T giving >= min_steps grid steps whose
    (conservatively double-buffered) working set fits the VMEM budget."""
    min_steps = max(1, min(int(min_steps), T))
    per_token = (E * D * w_itemsize + D * 4 + B * D * 4) * 2  # W slab + bias + out, x2 bufs
    fixed = (B * E * 4 + 2 * D * 4) * 2                        # x + gamma + beta, x2 bufs
    for cand in range(T, 0, -1):
        if T % cand:
            continue
        if T // cand < min_steps:
            continue
        if fixed + cand * per_token <= budget_bytes:
            return cand
    return 1


def text_proj_model(text_embeds, proj_w, proj_b, ln_gamma, ln_beta,
                    *, clip_extra_context_tokens, cross_attention_dim):
    """Pallas TPU implementation of TextProjModel.forward.

    text_embeds: (B, E)
    proj_w:      (E, T*D)  transposed PyTorch Linear weight.  Store in bf16 for
                           ~2x speed: the kernel is HBM-bound on this array and
                           accumulates in f32 on the MXU regardless of dtype.
    proj_b:      (T*D,)
    ln_gamma:    (D,)      LayerNorm weight
    ln_beta:     (D,)      LayerNorm bias
    returns:     (B, T, D) float32
    """
    B, E = text_embeds.shape
    T = int(clip_extra_context_tokens)
    D = int(cross_attention_dim)
    assert proj_w.shape == (E, T * D), "proj_w must be the transposed (E, T*D) layout"
    assert D % 128 == 0, "cross_attention_dim must be a multiple of 128 (lane width)"

    w_itemsize = jnp.dtype(proj_w.dtype).itemsize
    vmem_cap = _vmem_capacity_bytes()
    budget = vmem_cap // 2            # working-set budget (incl. double-buffering)
    vmem_limit = (vmem_cap * 3) // 4  # explicit scoped-VMEM limit for Mosaic

    # Force >= 2 grid steps on 2-TC parts (v7x) so "parallel" shards the
    # weight stream across both TensorCores; single-step on v5e/v6e.
    min_steps = _num_tensorcores()
    tc = _tokens_per_step(B, E, D, T, w_itemsize=w_itemsize,
                          budget_bytes=budget, min_steps=min_steps)
    n_steps = T // tc

    b2 = proj_b.reshape(1, T * D).astype(jnp.float32)
    g2 = ln_gamma.reshape(1, D).astype(jnp.float32)
    be2 = ln_beta.reshape(1, D).astype(jnp.float32)

    cost = pl.CostEstimate(
        flops=2 * B * E * T * D,
        transcendentals=B * T,  # one rsqrt per (row, token)
        bytes_accessed=(B * E * text_embeds.dtype.itemsize   # x
                        + E * T * D * w_itemsize             # weight (dominant)
                        + T * D * 4 + 2 * D * 4              # bias + gamma + beta
                        + B * T * D * 4),                    # output
    )

    out_flat = pl.pallas_call(
        _textproj_kernel,
        out_shape=jax.ShapeDtypeStruct((B, T * D), jnp.float32),
        grid_spec=pl.GridSpec(
            grid=(n_steps,),
            in_specs=[
                pl.BlockSpec((B, E), lambda g: (0, 0)),        # x (resident)
                pl.BlockSpec((E, tc * D), lambda g: (0, g)),   # W slab per step
                pl.BlockSpec((1, tc * D), lambda g: (0, g)),   # bias slab per step
                pl.BlockSpec((1, D), lambda g: (0, 0)),        # LN gamma (resident)
                pl.BlockSpec((1, D), lambda g: (0, 0)),        # LN beta  (resident)
            ],
            out_specs=pl.BlockSpec((B, tc * D), lambda g: (0, g)),
        ),
        compiler_params=pltpu.CompilerParams(
            dimension_semantics=("parallel",),  # disjoint output slabs per step
            vmem_limit_bytes=vmem_limit,
        ),
        cost_estimate=cost,
    )(text_embeds, proj_w, b2, g2, be2)

    return out_flat.reshape(B, T, D)


def _reference(text_embeds, proj_w, proj_b, ln_gamma, ln_beta, T, D):
    y = text_embeds.astype(jnp.float32) @ proj_w.astype(jnp.float32) + proj_b
    y = y.reshape(-1, T, D)
    mean = jnp.mean(y, axis=-1, keepdims=True)
    var = jnp.mean((y - mean) ** 2, axis=-1, keepdims=True)
    return (y - mean) / jnp.sqrt(var + LN_EPS) * ln_gamma + ln_beta


if __name__ == "__main__":
    # Small, TPU-tile-friendly shapes consistent with the module's forward.
    B = 8     # batch
    E = 128   # clip_embeddings_dim
    D = 256   # cross_attention_dim
    T = 4     # clip_extra_context_tokens

    key = jax.random.PRNGKey(0)
    k_x, k_w, k_b, k_g, k_be = jax.random.split(key, 5)

    text_embeds = jax.random.normal(k_x, (B, E), dtype=jnp.float32)
    proj_w = jax.random.normal(k_w, (E, T * D), dtype=jnp.float32) * 0.02
    proj_b = jax.random.normal(k_b, (T * D,), dtype=jnp.float32) * 0.01
    ln_gamma = 1.0 + 0.1 * jax.random.normal(k_g, (D,), dtype=jnp.float32)
    ln_beta = 0.1 * jax.random.normal(k_be, (D,), dtype=jnp.float32)

    ref = _reference(text_embeds, proj_w, proj_b, ln_gamma, ln_beta, T, D)

    # 1) f32 weight path: tight numerical check of the kernel math.
    out_f32 = text_proj_model(text_embeds, proj_w, proj_b, ln_gamma, ln_beta,
                              clip_extra_context_tokens=T,
                              cross_attention_dim=D)
    out_f32 = jax.block_until_ready(out_f32)
    assert out_f32.shape == (B, T, D)
    assert jnp.allclose(out_f32, ref, atol=1e-4, rtol=1e-4), "f32 path mismatch"

    # 2) bf16 weight path (recommended production storage — halves HBM weight
    #    traffic on this bandwidth-bound kernel); f32 MXU accumulation.
    proj_w_bf16 = proj_w.astype(jnp.bfloat16)
    out_bf16 = text_proj_model(text_embeds, proj_w_bf16, proj_b, ln_gamma, ln_beta,
                               clip_extra_context_tokens=T,
                               cross_attention_dim=D)
    out_bf16 = jax.block_until_ready(out_bf16)
    assert out_bf16.shape == (B, T, D)
    assert jnp.allclose(out_bf16, ref, atol=5e-2, rtol=5e-2), "bf16 path mismatch"

    print("KERNEL_OK")
</pallas_src>

<mosaic_0001>
module attributes {stable_mosaic.version = 11 : i64} {
  func.func @_textproj_kernel(%arg0: i32, %arg1: memref<8x128xf32, #tpu.memory_space<vmem>>, %arg2: memref<128x1024xf32, #tpu.memory_space<vmem>>, %arg3: memref<1x1024xf32, #tpu.memory_space<vmem>>, %arg4: memref<1x256xf32, #tpu.memory_space<vmem>>, %arg5: memref<1x256xf32, #tpu.memory_space<vmem>>, %arg6: memref<8x1024xf32, #tpu.memory_space<vmem>>) attributes {dimension_semantics = [#tpu.dimension_semantics<parallel>], iteration_bounds = array<i64: 1>, scalar_prefetch = 0 : i64, scratch_operands = 0 : i64, tpu.core_type = #tpu.core_type<tc>, window_params = [{pipeline_mode = #tpu.pipeline_mode<synchronous>, transform_indices = @transform_0, window_bounds = array<i64: 8, 128>}, {transform_indices = @transform_1, window_bounds = array<i64: 128, 1024>}, {transform_indices = @transform_2, window_bounds = array<i64: 1, 1024>}, {pipeline_mode = #tpu.pipeline_mode<synchronous>, transform_indices = @transform_3, window_bounds = array<i64: 1, 256>}, {pipeline_mode = #tpu.pipeline_mode<synchronous>, transform_indices = @transform_4, window_bounds = array<i64: 1, 256>}, {transform_indices = @transform_5, window_bounds = array<i64: 8, 1024>}]} {
    %c0 = arith.constant 0 : index
    %c0_0 = arith.constant 0 : index
    %0 = vector.load %arg4[%c0, %c0_0] : memref<1x256xf32, #tpu.memory_space<vmem>>, vector<1x256xf32>
    %c0_1 = arith.constant 0 : index
    %c0_2 = arith.constant 0 : index
    %1 = vector.load %arg5[%c0_1, %c0_2] : memref<1x256xf32, #tpu.memory_space<vmem>>, vector<1x256xf32>
    %c0_3 = arith.constant 0 : index
    %c0_4 = arith.constant 0 : index
    %2 = vector.load %arg1[%c0_3, %c0_4] : memref<8x128xf32, #tpu.memory_space<vmem>>, vector<8x128xf32>
    %c0_5 = arith.constant 0 : index
    %c0_6 = arith.constant 0 : index
    %3 = vector.load %arg2[%c0_5, %c0_6] : memref<128x1024xf32, #tpu.memory_space<vmem>>, vector<128x256xf32>
    %cst = arith.constant dense<0.000000e+00> : vector<8x256xf32>
    %4 = tpu.matmul %2, %3, %cst {dimension_numbers = #tpu.dot_dimension_numbers<[1], [0], [0], [1], [0, 0, 1, 1], [], []>} : vector<8x128xf32>, vector<128x256xf32>, vector<8x256xf32> -> vector<8x256xf32>
    %c0_7 = arith.constant 0 : index
    %c0_8 = arith.constant 0 : index
    %5 = vector.load %arg3[%c0_7, %c0_8] : memref<1x1024xf32, #tpu.memory_space<vmem>>, vector<1x256xf32>
    %6 = vector.broadcast %5 : vector<1x256xf32> to vector<8x256xf32>
    %7 = arith.addf %4, %6 : vector<8x256xf32>
    %cst_9 = arith.constant dense<0.000000e+00> : vector<8xf32>
    %8 = vector.multi_reduction <add>, %7, %cst_9 [1] : vector<8x256xf32> to vector<8xf32>
    %9 = vector.shape_cast %8 : vector<8xf32> to vector<8x1xf32>
    %cst_10 = arith.constant 3.906250e-03 : f32
    %10 = vector.broadcast %cst_10 : f32 to vector<8x1xf32>
    %11 = arith.mulf %9, %10 : vector<8x1xf32>
    %12 = vector.broadcast %11 : vector<8x1xf32> to vector<8x256xf32>
    %13 = arith.subf %7, %12 : vector<8x256xf32>
    %14 = arith.mulf %13, %13 : vector<8x256xf32>
    %cst_11 = arith.constant dense<0.000000e+00> : vector<8xf32>
    %15 = vector.multi_reduction <add>, %14, %cst_11 [1] : vector<8x256xf32> to vector<8xf32>
    %16 = vector.shape_cast %15 : vector<8xf32> to vector<8x1xf32>
    %cst_12 = arith.constant 3.906250e-03 : f32
    %17 = vector.broadcast %cst_12 : f32 to vector<8x1xf32>
    %18 = arith.mulf %16, %17 : vector<8x1xf32>
    %cst_13 = arith.constant 9.99999974E-6 : f32
    %19 = vector.broadcast %cst_13 : f32 to vector<8x1xf32>
    %20 = arith.addf %18, %19 : vector<8x1xf32>
    %21 = math.rsqrt %20 : vector<8x1xf32>
    %22 = vector.broadcast %21 : vector<8x1xf32> to vector<8x256xf32>
    %23 = arith.mulf %13, %22 : vector<8x256xf32>
    %24 = vector.broadcast %0 : vector<1x256xf32> to vector<8x256xf32>
    %25 = arith.mulf %23, %24 : vector<8x256xf32>
    %26 = vector.broadcast %1 : vector<1x256xf32> to vector<8x256xf32>
    %27 = arith.addf %25, %26 : vector<8x256xf32>
    %c0_14 = arith.constant 0 : index
    %c0_15 = arith.constant 0 : index
    %28 = vector.load %arg6[%c0_14, %c0_15] : memref<8x1024xf32, #tpu.memory_space<vmem>>, vector<8x256xf32>
    tpu.vector_store %arg6[%c0_14, %c0_15], %27 {strides = array<i32>} : memref<8x1024xf32, #tpu.memory_space<vmem>>, vector<8x256xf32>,
    %c0_16 = arith.constant 0 : index
    %c256 = arith.constant 256 : index
    %29 = vector.load %arg2[%c0_16, %c256] : memref<128x1024xf32, #tpu.memory_space<vmem>>, vector<128x256xf32>
    %cst_17 = arith.constant dense<0.000000e+00> : vector<8x256xf32>
    %30 = tpu.matmul %2, %29, %cst_17 {dimension_numbers = #tpu.dot_dimension_numbers<[1], [0], [0], [1], [0, 0, 1, 1], [], []>} : vector<8x128xf32>, vector<128x256xf32>, vector<8x256xf32> -> vector<8x256xf32>
    %c0_18 = arith.constant 0 : index
    %c256_19 = arith.constant 256 : index
    %31 = vector.load %arg3[%c0_18, %c256_19] : memref<1x1024xf32, #tpu.memory_space<vmem>>, vector<1x256xf32>
    %32 = vector.broadcast %31 : vector<1x256xf32> to vector<8x256xf32>
    %33 = arith.addf %30, %32 : vector<8x256xf32>
    %cst_20 = arith.constant dense<0.000000e+00> : vector<8xf32>
    %34 = vector.multi_reduction <add>, %33, %cst_20 [1] : vector<8x256xf32> to vector<8xf32>
    %35 = vector.shape_cast %34 : vector<8xf32> to vector<8x1xf32>
    %cst_21 = arith.constant 3.906250e-03 : f32
    %36 = vector.broadcast %cst_21 : f32 to vector<8x1xf32>
    %37 = arith.mulf %35, %36 : vector<8x1xf32>
    %38 = vector.broadcast %37 : vector<8x1xf32> to vector<8x256xf32>
    %39 = arith.subf %33, %38 : vector<8x256xf32>
    %40 = arith.mulf %39, %39 : vector<8x256xf32>
    %cst_22 = arith.constant dense<0.000000e+00> : vector<8xf32>
    %41 = vector.multi_reduction <add>, %40, %cst_22 [1] : vector<8x256xf32> to vector<8xf32>
    %42 = vector.shape_cast %41 : vector<8xf32> to vector<8x1xf32>
    %cst_23 = arith.constant 3.906250e-03 : f32
    %43 = vector.broadcast %cst_23 : f32 to vector<8x1xf32>
    %44 = arith.mulf %42, %43 : vector<8x1xf32>
    %cst_24 = arith.constant 9.99999974E-6 : f32
    %45 = vector.broadcast %cst_24 : f32 to vector<8x1xf32>
    %46 = arith.addf %44, %45 : vector<8x1xf32>
    %47 = math.rsqrt %46 : vector<8x1xf32>
    %48 = vector.broadcast %47 : vector<8x1xf32> to vector<8x256xf32>
    %49 = arith.mulf %39, %48 : vector<8x256xf32>
    %50 = vector.broadcast %0 : vector<1x256xf32> to vector<8x256xf32>
    %51 = arith.mulf %49, %50 : vector<8x256xf32>
    %52 = vector.broadcast %1 : vector<1x256xf32> to vector<8x256xf32>
    %53 = arith.addf %51, %52 : vector<8x256xf32>
    %c0_25 = arith.constant 0 : index
    %c256_26 = arith.constant 256 : index
    %54 = vector.load %arg6[%c0_25, %c256_26] : memref<8x1024xf32, #tpu.memory_space<vmem>>, vector<8x256xf32>
    tpu.vector_store %arg6[%c0_25, %c256_26], %53 {strides = array<i32>} : memref<8x1024xf32, #tpu.memory_space<vmem>>, vector<8x256xf32>,
    %c0_27 = arith.constant 0 : index
    %c512 = arith.constant 512 : index
    %55 = vector.load %arg2[%c0_27, %c512] : memref<128x1024xf32, #tpu.memory_space<vmem>>, vector<128x256xf32>
    %cst_28 = arith.constant dense<0.000000e+00> : vector<8x256xf32>
    %56 = tpu.matmul %2, %55, %cst_28 {dimension_numbers = #tpu.dot_dimension_numbers<[1], [0], [0], [1], [0, 0, 1, 1], [], []>} : vector<8x128xf32>, vector<128x256xf32>, vector<8x256xf32> -> vector<8x256xf32>
    %c0_29 = arith.constant 0 : index
    %c512_30 = arith.constant 512 : index
    %57 = vector.load %arg3[%c0_29, %c512_30] : memref<1x1024xf32, #tpu.memory_space<vmem>>, vector<1x256xf32>
    %58 = vector.broadcast %57 : vector<1x256xf32> to vector<8x256xf32>
    %59 = arith.addf %56, %58 : vector<8x256xf32>
    %cst_31 = arith.constant dense<0.000000e+00> : vector<8xf32>
    %60 = vector.multi_reduction <add>, %59, %cst_31 [1] : vector<8x256xf32> to vector<8xf32>
    %61 = vector.shape_cast %60 : vector<8xf32> to vector<8x1xf32>
    %cst_32 = arith.constant 3.906250e-03 : f32
    %62 = vector.broadcast %cst_32 : f32 to vector<8x1xf32>
    %63 = arith.mulf %61, %62 : vector<8x1xf32>
    %64 = vector.broadcast %63 : vector<8x1xf32> to vector<8x256xf32>
    %65 = arith.subf %59, %64 : vector<8x256xf32>
    %66 = arith.mulf %65, %65 : vector<8x256xf32>
    %cst_33 = arith.constant dense<0.000000e+00> : vector<8xf32>
    %67 = vector.multi_reduction <add>, %66, %cst_33 [1] : vector<8x256xf32> to vector<8xf32>
    %68 = vector.shape_cast %67 : vector<8xf32> to vector<8x1xf32>
    %cst_34 = arith.constant 3.906250e-03 : f32
    %69 = vector.broadcast %cst_34 : f32 to vector<8x1xf32>
    %70 = arith.mulf %68, %69 : vector<8x1xf32>
    %cst_35 = arith.constant 9.99999974E-6 : f32
    %71 = vector.broadcast %cst_35 : f32 to vector<8x1xf32>
    %72 = arith.addf %70, %71 : vector<8x1xf32>
    %73 = math.rsqrt %72 : vector<8x1xf32>
    %74 = vector.broadcast %73 : vector<8x1xf32> to vector<8x256xf32>
    %75 = arith.mulf %65, %74 : vector<8x256xf32>
    %76 = vector.broadcast %0 : vector<1x256xf32> to vector<8x256xf32>
    %77 = arith.mulf %75, %76 : vector<8x256xf32>
    %78 = vector.broadcast %1 : vector<1x256xf32> to vector<8x256xf32>
    %79 = arith.addf %77, %78 : vector<8x256xf32>
    %c0_36 = arith.constant 0 : index
    %c512_37 = arith.constant 512 : index
    %80 = vector.load %arg6[%c0_36, %c512_37] : memref<8x1024xf32, #tpu.memory_space<vmem>>, vector<8x256xf32>
    tpu.vector_store %arg6[%c0_36, %c512_37], %79 {strides = array<i32>} : memref<8x1024xf32, #tpu.memory_space<vmem>>, vector<8x256xf32>,
    %c0_38 = arith.constant 0 : index
    %c768 = arith.constant 768 : index
    %81 = vector.load %arg2[%c0_38, %c768] : memref<128x1024xf32, #tpu.memory_space<vmem>>, vector<128x256xf32>
    %cst_39 = arith.constant dense<0.000000e+00> : vector<8x256xf32>
    %82 = tpu.matmul %2, %81, %cst_39 {dimension_numbers = #tpu.dot_dimension_numbers<[1], [0], [0], [1], [0, 0, 1, 1], [], []>} : vector<8x128xf32>, vector<128x256xf32>, vector<8x256xf32> -> vector<8x256xf32>
    %c0_40 = arith.constant 0 : index
    %c768_41 = arith.constant 768 : index
    %83 = vector.load %arg3[%c0_40, %c768_41] : memref<1x1024xf32, #tpu.memory_space<vmem>>, vector<1x256xf32>
    %84 = vector.broadcast %83 : vector<1x256xf32> to vector<8x256xf32>
    %85 = arith.addf %82, %84 : vector<8x256xf32>
    %cst_42 = arith.constant dense<0.000000e+00> : vector<8xf32>
    %86 = vector.multi_reduction <add>, %85, %cst_42 [1] : vector<8x256xf32> to vector<8xf32>
    %87 = vector.shape_cast %86 : vector<8xf32> to vector<8x1xf32>
    %cst_43 = arith.constant 3.906250e-03 : f32
    %88 = vector.broadcast %cst_43 : f32 to vector<8x1xf32>
    %89 = arith.mulf %87, %88 : vector<8x1xf32>
    %90 = vector.broadcast %89 : vector<8x1xf32> to vector<8x256xf32>
    %91 = arith.subf %85, %90 : vector<8x256xf32>
    %92 = arith.mulf %91, %91 : vector<8x256xf32>
    %cst_44 = arith.constant dense<0.000000e+00> : vector<8xf32>
    %93 = vector.multi_reduction <add>, %92, %cst_44 [1] : vector<8x256xf32> to vector<8xf32>
    %94 = vector.shape_cast %93 : vector<8xf32> to vector<8x1xf32>
    %cst_45 = arith.constant 3.906250e-03 : f32
    %95 = vector.broadcast %cst_45 : f32 to vector<8x1xf32>
    %96 = arith.mulf %94, %95 : vector<8x1xf32>
    %cst_46 = arith.constant 9.99999974E-6 : f32
    %97 = vector.broadcast %cst_46 : f32 to vector<8x1xf32>
    %98 = arith.addf %96, %97 : vector<8x1xf32>
    %99 = math.rsqrt %98 : vector<8x1xf32>
    %100 = vector.broadcast %99 : vector<8x1xf32> to vector<8x256xf32>
    %101 = arith.mulf %91, %100 : vector<8x256xf32>
    %102 = vector.broadcast %0 : vector<1x256xf32> to vector<8x256xf32>
    %103 = arith.mulf %101, %102 : vector<8x256xf32>
    %104 = vector.broadcast %1 : vector<1x256xf32> to vector<8x256xf32>
    %105 = arith.addf %103, %104 : vector<8x256xf32>
    %c0_47 = arith.constant 0 : index
    %c768_48 = arith.constant 768 : index
    %106 = vector.load %arg6[%c0_47, %c768_48] : memref<8x1024xf32, #tpu.memory_space<vmem>>, vector<8x256xf32>
    tpu.vector_store %arg6[%c0_47, %c768_48], %105 {strides = array<i32>} : memref<8x1024xf32, #tpu.memory_space<vmem>>, vector<8x256xf32>,
    return
  }
  func.func @transform_0(%arg0: i32) -> (i32, i32) {
    %c0_i32 = arith.constant 0 : i32
    %c0_i32_0 = arith.constant 0 : i32
    %c0_i32_1 = arith.constant 0 : i32
    return %c0_i32, %c0_i32_0 : i32, i32
  }
  func.func @transform_1(%arg0: i32) -> (i32, i32) {
    %c0_i32 = arith.constant 0 : i32
    %c0_i32_0 = arith.constant 0 : i32
    return %c0_i32, %arg0 : i32, i32
  }
  func.func @transform_2(%arg0: i32) -> (i32, i32) {
    %c0_i32 = arith.constant 0 : i32
    %c0_i32_0 = arith.constant 0 : i32
    return %c0_i32, %arg0 : i32, i32
  }
  func.func @transform_3(%arg0: i32) -> (i32, i32) {
    %c0_i32 = arith.constant 0 : i32
    %c0_i32_0 = arith.constant 0 : i32
    %c0_i32_1 = arith.constant 0 : i32
    return %c0_i32, %c0_i32_0 : i32, i32
  }
  func.func @transform_4(%arg0: i32) -> (i32, i32) {
    %c0_i32 = arith.constant 0 : i32
    %c0_i32_0 = arith.constant 0 : i32
    %c0_i32_1 = arith.constant 0 : i32
    return %c0_i32, %c0_i32_0 : i32, i32
  }
  func.func @transform_5(%arg0: i32) -> (i32, i32) {
    %c0_i32 = arith.constant 0 : i32
    %c0_i32_0 = arith.constant 0 : i32
    return %c0_i32, %arg0 : i32, i32
  }
}

</mosaic_0001>

<llo_original>
// kernel: tpu_custom_call.1
$region0: #{tpu_custom_call.1}
  #allocation0 [shape = 'u32[]', space=smem, size = 0x4, offset = 0x4, fixed_abs, tag = 'smem constant byte address 0x4 - core index']
  #allocation1 [shape = 'u32[72,128]{1,0:T(1,128)}', space=vmem, size = 0x9000, scoped, tag = 'internal scratch']
  %s0 = inlined_call_operand.hbm [shape: f32[8,128], index: 0, kind: input, shape index: {}]
  %s1 = inlined_call_operand.hbm [shape: f32[128,1024], index: 1, kind: input, shape index: {}]
  %s2 = inlined_call_operand.hbm [shape: f32[1,1024], index: 2, kind: input, shape index: {}]
  %s3 = inlined_call_operand.vmem [shape: f32[1,256], index: 3, kind: input, shape index: {}]
  %s4 = inlined_call_operand.hbm [shape: f32[1,256], index: 4, kind: input, shape index: {}]
  %s5 = inlined_call_operand.hbm [shape: f32[8,1024], index: 5, kind: output, shape index: {}]
  %s6 = sld [smem:[#allocation0]]
  $region46: #{tpu_custom_call.1} parent=0
    _
  %s8 = ssub.s32 1, %s6
  %s9 = scalar_select 0, %s8, %s6
  $region1: #{tpu_custom_call.1} parent=0
    #allocation2 [shape = 'u8[4096]{0}', space=vmem, size = 0x1000, scoped, tag = 'input window, operand 0, single buffered']
    #allocation3 [shape = 's32[1]{0}', space=sflag, size = 0x4, scoped, tag = 'scoped memory for tpu_custom_call.1']
    #allocation4 [shape = 's32[1]{0}', space=sflag, size = 0x4, scoped, tag = 'scoped memory for tpu_custom_call.1']
    #allocation5 [shape = 'u8[524288]{0}', space=vmem, size = 0x80000, scoped, tag = 'input window, operand 1, single buffered']
    #allocation6 [shape = 's32[1]{0}', space=sflag, size = 0x4, scoped, tag = 'scoped memory for tpu_custom_call.1']
    #allocation7 [shape = 'u8[4096]{0}', space=vmem, size = 0x1000, scoped, tag = 'input window, operand 2, single buffered']
    #allocation8 [shape = 'u8[1024]{0}', space=vmem, size = 0x400, scoped, tag = 'input window, operand 4, single buffered']
    #allocation9 [shape = 's32[1]{0}', space=sflag, size = 0x4, scoped, tag = 'scoped memory for tpu_custom_call.1']
    #allocation10 [shape = 'u8[32768]{0}', space=vmem, size = 0x8000, scoped, tag = 'output window, operand 0, single buffered']
    %10 = vsyncpa [#allocation3], 0
    %11 = vsyncpa [#allocation6], 0
    %12 = vsyncpa [#allocation9], 0
    %13 = vsyncpa [#allocation4], 0
    // Predicated region
    $region2: #{tpu_custom_call.1} parent=1 // pred_check
      _
    $region3: #{tpu_custom_call.1} parent=1 // pred_check_branch
      %15 = sbr.rel (0) target = $region5
    $region4: #{tpu_custom_call.1} parent=1 // pred_region
      %17 = vsyncadd [#allocation3], 0
      %s19 = sshll.u32 %s0, 4
      %s20 = int_to_ptr.hbm [resolvable:$true] %s19
      %s21 = sshll.u32 [#allocation2], 4
      %s22 = int_to_ptr.vmem [resolvable:$true] %s21
      %24 = dma.hbm_to_vmem [thread:$0]  %s20, 128, %s22, [#allocation3]
    $region5: #{tpu_custom_call.1} parent=1 // pred_fallthru
      _
    // Predicated region
    $region6: #{tpu_custom_call.1} parent=1 // pred_check
      _
    $region7: #{tpu_custom_call.1} parent=1 // pred_check_branch
      %26 = sbr.rel (0) target = $region9
    $region8: #{tpu_custom_call.1} parent=1 // pred_region
      %28 = vsyncadd [#allocation6], 0
      %s29 = sshll.u32 %s1, 4
      %s30 = int_to_ptr.hbm [resolvable:$true] %s29
      %s31 = sshll.u32 [#allocation5], 4
      %s32 = int_to_ptr.vmem [resolvable:$true] %s31
      %37 = dma.hbm_to_vmem [thread:$0]  %s30, 16384, %s32, [#allocation6], 1024, 1024, 64
    $region9: #{tpu_custom_call.1} parent=1 // pred_fallthru
      _
    // Predicated region
    $region10: #{tpu_custom_call.1} parent=1 // pred_check
      _
    $region11: #{tpu_custom_call.1} parent=1 // pred_check_branch
      %39 = sbr.rel (0) target = $region13
    $region12: #{tpu_custom_call.1} parent=1 // pred_region
      %41 = vsyncadd [#allocation6], 0
      %s43 = sshll.u32 %s2, 4
      %s44 = int_to_ptr.hbm [resolvable:$true] %s43
      %s45 = sshll.u32 [#allocation7], 4
      %s46 = int_to_ptr.vmem [resolvable:$true] %s45
      %48 = dma.hbm_to_vmem [thread:$0]  %s44, 128, %s46, [#allocation6]
    $region13: #{tpu_custom_call.1} parent=1 // pred_fallthru
      _
    // Predicated region
    $region14: #{tpu_custom_call.1} parent=1 // pred_check
      _
    $region15: #{tpu_custom_call.1} parent=1 // pred_check_branch
      %50 = sbr.rel (0) target = $region17
    $region16: #{tpu_custom_call.1} parent=1 // pred_region
      _
    $region17: #{tpu_custom_call.1} parent=1 // pred_fallthru
      _
    // Predicated region
    $region18: #{tpu_custom_call.1} parent=1 // pred_check
      _
    $region19: #{tpu_custom_call.1} parent=1 // pred_check_branch
      %52 = sbr.rel (0) target = $region21
    $region20: #{tpu_custom_call.1} parent=1 // pred_region
      %54 = vsyncadd [#allocation9], 0
      %s56 = sshll.u32 %s4, 4
      %s57 = int_to_ptr.hbm [resolvable:$true] %s56
      %s58 = sshll.u32 [#allocation8], 4
      %s59 = int_to_ptr.vmem [resolvable:$true] %s58
      %61 = dma.hbm_to_vmem [thread:$0]  %s57, 32, %s59, [#allocation9]
    $region21: #{tpu_custom_call.1} parent=1 // pred_fallthru
      _
    // Predicated region
    $region22: #{tpu_custom_call.1} parent=1 // pred_check
      _
    $region23: #{tpu_custom_call.1} parent=1 // pred_check_branch
      %63 = sbr.rel (0) target = $region25
    $region24: #{tpu_custom_call.1} parent=1 // pred_region
      %65 = dma.done [#allocation3], 128
    $region25: #{tpu_custom_call.1} parent=1 // pred_fallthru
      _
    // Predicated region
    $region26: #{tpu_custom_call.1} parent=1 // pred_check
      _
    $region27: #{tpu_custom_call.1} parent=1 // pred_check_branch
      %67 = sbr.rel (0) target = $region29
    $region28: #{tpu_custom_call.1} parent=1 // pred_region
      %69 = dma.done [#allocation6], 16384
    $region29: #{tpu_custom_call.1} parent=1 // pred_fallthru
      _
    // Predicated region
    $region30: #{tpu_custom_call.1} parent=1 // pred_check
      _
    $region31: #{tpu_custom_call.1} parent=1 // pred_check_branch
      %71 = sbr.rel (0) target = $region33
    $region32: #{tpu_custom_call.1} parent=1 // pred_region
      %73 = dma.done [#allocation6], 128
    $region33: #{tpu_custom_call.1} parent=1 // pred_fallthru
      _
    // Predicated region
    $region34: #{tpu_custom_call.1} parent=1 // pred_check
      _
    $region35: #{tpu_custom_call.1} parent=1 // pred_check_branch
      %75 = sbr.rel (0) target = $region37
    $region36: #{tpu_custom_call.1} parent=1 // pred_region
      %77 = dma.done [#allocation9], 32
    $region37: #{tpu_custom_call.1} parent=1 // pred_fallthru
      _
    %v78 = vld [vmem:[%s3] sm:$0x3]
    %v79 = vld [vmem:[#allocation8] sm:$0x3]
    %v80 = vld [vmem:[#allocation2] sm:$0xff]
    %v81 = vld [vmem:[#allocation5] sm:$0xff]
    %v82 = vld [vmem:[#allocation5 + $0x8] sm:$0xff]
    %v83 = vld [vmem:[#allocation5 + $0x40] sm:$0xff]
    %v84 = vld [vmem:[#allocation5 + $0x48] sm:$0xff]
    %v85 = vld [vmem:[#allocation5 + $0x80] sm:$0xff]
    %v86 = vld [vmem:[#allocation5 + $0x88] sm:$0xff]
    %v87 = vld [vmem:[#allocation5 + $0xc0] sm:$0xff]
    %v88 = vld [vmem:[#allocation5 + $0xc8] sm:$0xff]
    %v89 = vld [vmem:[#allocation5 + $0x100] sm:$0xff]
    %v90 = vld [vmem:[#allocation5 + $0x108] sm:$0xff]
    %v91 = vld [vmem:[#allocation5 + $0x140] sm:$0xff]
    %v92 = vld [vmem:[#allocation5 + $0x148] sm:$0xff]
    %v93 = vld [vmem:[#allocation5 + $0x180] sm:$0xff]
    %v94 = vld [vmem:[#allocation5 + $0x188] sm:$0xff]
    %v95 = vld [vmem:[#allocation5 + $0x1c0] sm:$0xff]
    %v96 = vld [vmem:[#allocation5 + $0x1c8] sm:$0xff]
    %v97 = vld [vmem:[#allocation5 + $0x200] sm:$0xff]
    %v98 = vld [vmem:[#allocation5 + $0x208] sm:$0xff]
    %v99 = vld [vmem:[#allocation5 + $0x240] sm:$0xff]
    %v100 = vld [vmem:[#allocation5 + $0x248] sm:$0xff]
    %v101 = vld [vmem:[#allocation5 + $0x280] sm:$0xff]
    %v102 = vld [vmem:[#allocation5 + $0x288] sm:$0xff]
    %v103 = vld [vmem:[#allocation5 + $0x2c0] sm:$0xff]
    %v104 = vld [vmem:[#allocation5 + $0x2c8] sm:$0xff]
    %v105 = vld [vmem:[#allocation5 + $0x300] sm:$0xff]
    %v106 = vld [vmem:[#allocation5 + $0x308] sm:$0xff]
    %v107 = vld [vmem:[#allocation5 + $0x340] sm:$0xff]
    %v108 = vld [vmem:[#allocation5 + $0x348] sm:$0xff]
    %v109 = vld [vmem:[#allocation5 + $0x380] sm:$0xff]
    %v110 = vld [vmem:[#allocation5 + $0x388] sm:$0xff]
    %v111 = vld [vmem:[#allocation5 + $0x3c0] sm:$0xff]
    %v112 = vld [vmem:[#allocation5 + $0x3c8] sm:$0xff]
    %v113 = vld [vmem:[#allocation7] sm:$0x3]
    %v115 = vperm.slane %v113, 0
    %v116 = vperm.slane %v113, 1
    %119 = vmatpush.msra.mxu0 %v111
    %120 = vmatpush.msra.mxu0 %v109
    %121 = vmatpush.msra.mxu0 %v107
    %122 = vmatpush.msra.mxu0 %v105
    %123 = vmatpush.msra.mxu0 %v103
    %124 = vmatpush.msra.mxu0 %v101
    %125 = vmatpush.msra.mxu0 %v99
    %126 = vmatpush.msra.mxu0 %v97
    %127 = vmatpush.msra.mxu0 %v95
    %128 = vmatpush.msra.mxu0 %v93
    %129 = vmatpush.msra.mxu0 %v91
    %130 = vmatpush.msra.mxu0 %v89
    %131 = vmatpush.msra.mxu0 %v87
    %132 = vmatpush.msra.mxu0 %v85
    %133 = vmatpush.msra.mxu0 %v83
    %134 = vmatpush.msra.mxu0 %v81
    %135 = vmatmul.f32.gmra.mxu0 %v80
    %v136 = vpop.f32.mrf.mxu0
    %v137 = vadd.f32 %v115, %v136
    %138 = vdwg.mxu0
    %139 = vmatpush.msra.mxu0 %v112
    %140 = vmatpush.msra.mxu0 %v110
    %141 = vmatpush.msra.mxu0 %v108
    %142 = vmatpush.msra.mxu0 %v106
    %143 = vmatpush.msra.mxu0 %v104
    %144 = vmatpush.msra.mxu0 %v102
    %145 = vmatpush.msra.mxu0 %v100
    %146 = vmatpush.msra.mxu0 %v98
    %147 = vmatpush.msra.mxu0 %v96
    %148 = vmatpush.msra.mxu0 %v94
    %149 = vmatpush.msra.mxu0 %v92
    %150 = vmatpush.msra.mxu0 %v90
    %151 = vmatpush.msra.mxu0 %v88
    %152 = vmatpush.msra.mxu0 %v86
    %153 = vmatpush.msra.mxu0 %v84
    %154 = vmatpush.msra.mxu0 %v82
    %155 = vmatmul.f32.gmra.mxu0 %v80
    %v156 = vpop.f32.mrf.mxu0
    %v157 = vadd.f32 %v116, %v156
    %158 = vdwg.mxu0
    %v159 = vadd.f32 %v137, %v157
    %160 = vadd.xlane.f32.xlu0 %v159
    %v161 = vpop.xlane.xlu0 %160
    %v162 = vmul.f32 %v161, 0.00390625
    %v163 = vsub.f32 %v137, %v162
    %v164 = vsub.f32 %v157, %v162
    %v165 = vmul.f32 %v163, %v163
    %v166 = vmul.f32 %v164, %v164
    %v167 = vadd.f32 %v165, %v166
    %168 = vadd.xlane.f32.xlu0 %v167
    %v169 = vpop.xlane.xlu0 %168
    %v170 = vmul.f32 %v169, 0.00390625
    %v171 = vadd.f32 %v170, 1e-05
    %v172 = vrsqrt.pop %v171
    %v173 = vmul.f32 %v172, %v171
    %v174 = vmul.f32 %v173, %v172
    %v175 = vmul.f32 0.5, %v174
    %v176 = vsub.f32 1.5, %v175
    %v177 = vmul.f32 %v172, %v176
    %vm178 = vweird.f32 %v171
    %vm179 = vweird.f32 %v172
    %vm180 = vmor %vm178, %vm179
    %v181 = vsel %vm180, %v172, %v177
    %v182 = vmul.f32 %v163, %v181
    %v183 = vmul.f32 %v164, %v181
    %v185 = vperm.slane %v78, 0
    %v186 = vperm.slane %v78, 1
    %v189 = vmul.f32 %v182, %v185
    %v190 = vmul.f32 %v183, %v186
    %v192 = vperm.slane %v79, 0
    %v193 = vperm.slane %v79, 1
    %v196 = vadd.f32 %v189, %v192
    %v197 = vadd.f32 %v190, %v193
    %198 = vst [vmem:[#allocation10] sm:$0xff] %v196
    %199 = vst [vmem:[#allocation10 + $0x8] sm:$0xff] %v197
    %v200 = vld [vmem:[#allocation5 + $0x10] sm:$0xff]
    %v201 = vld [vmem:[#allocation5 + $0x18] sm:$0xff]
    %v202 = vld [vmem:[#allocation5 + $0x50] sm:$0xff]
    %v203 = vld [vmem:[#allocation5 + $0x58] sm:$0xff]
    %v204 = vld [vmem:[#allocation5 + $0x90] sm:$0xff]
    %v205 = vld [vmem:[#allocation5 + $0x98] sm:$0xff]
    %v206 = vld [vmem:[#allocation5 + $0xd0] sm:$0xff]
    %v207 = vld [vmem:[#allocation5 + $0xd8] sm:$0xff]
    %v208 = vld [vmem:[#allocation5 + $0x110] sm:$0xff]
    %v209 = vld [vmem:[#allocation5 + $0x118] sm:$0xff]
    %v210 = vld [vmem:[#allocation5 + $0x150] sm:$0xff]
    %v211 = vld [vmem:[#allocation5 + $0x158] sm:$0xff]
    %v212 = vld [vmem:[#allocation5 + $0x190] sm:$0xff]
    %v213 = vld [vmem:[#allocation5 + $0x198] sm:$0xff]
    %v214 = vld [vmem:[#allocation5 + $0x1d0] sm:$0xff]
    %v215 = vld [vmem:[#allocation5 + $0x1d8] sm:$0xff]
    %v216 = vld [vmem:[#allocation5 + $0x210] sm:$0xff]
    %v217 = vld [vmem:[#allocation5 + $0x218] sm:$0xff]
    %v218 = vld [vmem:[#allocation5 + $0x250] sm:$0xff]
    %v219 = vld [vmem:[#allocation5 + $0x258] sm:$0xff]
    %v220 = vld [vmem:[#allocation5 + $0x290] sm:$0xff]
    %v221 = vld [vmem:[#allocation5 + $0x298] sm:$0xff]
    %v222 = vld [vmem:[#allocation5 + $0x2d0] sm:$0xff]
    %v223 = vld [vmem:[#allocation5 + $0x2d8] sm:$0xff]
    %v224 = vld [vmem:[#allocation5 + $0x310] sm:$0xff]
    %v225 = vld [vmem:[#allocation5 + $0x318] sm:$0xff]
    %v226 = vld [vmem:[#allocation5 + $0x350] sm:$0xff]
    %v227 = vld [vmem:[#allocation5 + $0x358] sm:$0xff]
    %v228 = vld [vmem:[#allocation5 + $0x390] sm:$0xff]
    %v229 = vld [vmem:[#allocation5 + $0x398] sm:$0xff]
    %v230 = vld [vmem:[#allocation5 + $0x3d0] sm:$0xff]
    %v231 = vld [vmem:[#allocation5 + $0x3d8] sm:$0xff]
    %v232 = vld [vmem:[#allocation7 + $0x2] sm:$0x3]
    %v234 = vperm.slane %v232, 0
    %v235 = vperm.slane %v232, 1
    %238 = vmatpush.msra.mxu0 %v230
    %239 = vmatpush.msra.mxu0 %v228
    %240 = vmatpush.msra.mxu0 %v226
    %241 = vmatpush.msra.mxu0 %v224
    %242 = vmatpush.msra.mxu0 %v222
    %243 = vmatpush.msra.mxu0 %v220
    %244 = vmatpush.msra.mxu0 %v218
    %245 = vmatpush.msra.mxu0 %v216
    %246 = vmatpush.msra.mxu0 %v214
    %247 = vmatpush.msra.mxu0 %v212
    %248 = vmatpush.msra.mxu0 %v210
    %249 = vmatpush.msra.mxu0 %v208
    %250 = vmatpush.msra.mxu0 %v206
    %251 = vmatpush.msra.mxu0 %v204
    %252 = vmatpush.msra.mxu0 %v202
    %253 = vmatpush.msra.mxu0 %v200
    %254 = vmatmul.f32.gmra.mxu0 %v80
    %v255 = vpop.f32.mrf.mxu0
    %v256 = vadd.f32 %v234, %v255
    %257 = vdwg.mxu0
    %258 = vmatpush.msra.mxu0 %v231
    %259 = vmatpush.msra.mxu0 %v229
    %260 = vmatpush.msra.mxu0 %v227
    %261 = vmatpush.msra.mxu0 %v225
    %262 = vmatpush.msra.mxu0 %v223
    %263 = vmatpush.msra.mxu0 %v221
    %264 = vmatpush.msra.mxu0 %v219
    %265 = vmatpush.msra.mxu0 %v217
    %266 = vmatpush.msra.mxu0 %v215
    %267 = vmatpush.msra.mxu0 %v213
    %268 = vmatpush.msra.mxu0 %v211
    %269 = vmatpush.msra.mxu0 %v209
    %270 = vmatpush.msra.mxu0 %v207
    %271 = vmatpush.msra.mxu0 %v205
    %272 = vmatpush.msra.mxu0 %v203
    %273 = vmatpush.msra.mxu0 %v201
    %274 = vmatmul.f32.gmra.mxu0 %v80
    %v275 = vpop.f32.mrf.mxu0
    %v276 = vadd.f32 %v235, %v275
    %277 = vdwg.mxu0
    %v278 = vadd.f32 %v256, %v276
    %279 = vadd.xlane.f32.xlu0 %v278
    %v280 = vpop.xlane.xlu0 %279
    %v281 = vmul.f32 %v280, 0.00390625
    %v282 = vsub.f32 %v256, %v281
    %v283 = vsub.f32 %v276, %v281
    %v284 = vmul.f32 %v282, %v282
    %v285 = vmul.f32 %v283, %v283
    %v286 = vadd.f32 %v284, %v285
    %287 = vadd.xlane.f32.xlu0 %v286
    %v288 = vpop.xlane.xlu0 %287
    %v289 = vmul.f32 %v288, 0.00390625
    %v290 = vadd.f32 %v289, 1e-05
    %v291 = vrsqrt.pop %v290
    %v292 = vmul.f32 %v291, %v290
    %v293 = vmul.f32 %v292, %v291
    %v294 = vmul.f32 0.5, %v293
    %v295 = vsub.f32 1.5, %v294
    %v296 = vmul.f32 %v291, %v295
    %vm297 = vweird.f32 %v290
    %vm298 = vweird.f32 %v291
    %vm299 = vmor %vm297, %vm298
    %v300 = vsel %vm299, %v291, %v296
    %v301 = vmul.f32 %v282, %v300
    %v302 = vmul.f32 %v283, %v300
    %v303 = vmul.f32 %v301, %v185
    %v304 = vmul.f32 %v302, %v186
    %v305 = vadd.f32 %v303, %v192
    %v306 = vadd.f32 %v304, %v193
    %307 = vst [vmem:[#allocation10 + $0x10] sm:$0xff] %v305
    %308 = vst [vmem:[#allocation10 + $0x18] sm:$0xff] %v306
    %v309 = vld [vmem:[#allocation5 + $0x20] sm:$0xff]
    %v310 = vld [vmem:[#allocation5 + $0x28] sm:$0xff]
    %v311 = vld [vmem:[#allocation5 + $0x60] sm:$0xff]
    %v312 = vld [vmem:[#allocation5 + $0x68] sm:$0xff]
    %v313 = vld [vmem:[#allocation5 + $0xa0] sm:$0xff]
    %v314 = vld [vmem:[#allocation5 + $0xa8] sm:$0xff]
    %v315 = vld [vmem:[#allocation5 + $0xe0] sm:$0xff]
    %v316 = vld [vmem:[#allocation5 + $0xe8] sm:$0xff]
    %v317 = vld [vmem:[#allocation5 + $0x120] sm:$0xff]
    %v318 = vld [vmem:[#allocation5 + $0x128] sm:$0xff]
    %v319 = vld [vmem:[#allocation5 + $0x160] sm:$0xff]
    %v320 = vld [vmem:[#allocation5 + $0x168] sm:$0xff]
    %v321 = vld [vmem:[#allocation5 + $0x1a0] sm:$0xff]
    %v322 = vld [vmem:[#allocation5 + $0x1a8] sm:$0xff]
    %v323 = vld [vmem:[#allocation5 + $0x1e0] sm:$0xff]
    %v324 = vld [vmem:[#allocation5 + $0x1e8] sm:$0xff]
    %v325 = vld [vmem:[#allocation5 + $0x220] sm:$0xff]
    %v326 = vld [vmem:[#allocation5 + $0x228] sm:$0xff]
    %v327 = vld [vmem:[#allocation5 + $0x260] sm:$0xff]
    %v328 = vld [vmem:[#allocation5 + $0x268] sm:$0xff]
    %v329 = vld [vmem:[#allocation5 + $0x2a0] sm:$0xff]
    %v330 = vld [vmem:[#allocation5 + $0x2a8] sm:$0xff]
    %v331 = vld [vmem:[#allocation5 + $0x2e0] sm:$0xff]
    %v332 = vld [vmem:[#allocation5 + $0x2e8] sm:$0xff]
    %v333 = vld [vmem:[#allocation5 + $0x320] sm:$0xff]
    %v334 = vld [vmem:[#allocation5 + $0x328] sm:$0xff]
    %v335 = vld [vmem:[#allocation5 + $0x360] sm:$0xff]
    %v336 = vld [vmem:[#allocation5 + $0x368] sm:$0xff]
    %v337 = vld [vmem:[#allocation5 + $0x3a0] sm:$0xff]
    %v338 = vld [vmem:[#allocation5 + $0x3a8] sm:$0xff]
    %v339 = vld [vmem:[#allocation5 + $0x3e0] sm:$0xff]
    %v340 = vld [vmem:[#allocation5 + $0x3e8] sm:$0xff]
    %v341 = vld [vmem:[#allocation7 + $0x4] sm:$0x3]
    %v343 = vperm.slane %v341, 0
    %v344 = vperm.slane %v341, 1
    %347 = vmatpush.msra.mxu0 %v339
    %348 = vmatpush.msra.mxu0 %v337
    %349 = vmatpush.msra.mxu0 %v335
    %350 = vmatpush.msra.mxu0 %v333
    %351 = vmatpush.msra.mxu0 %v331
    %352 = vmatpush.msra.mxu0 %v329
    %353 = vmatpush.msra.mxu0 %v327
    %354 = vmatpush.msra.mxu0 %v325
    %355 = vmatpush.msra.mxu0 %v323
    %356 = vmatpush.msra.mxu0 %v321
    %357 = vmatpush.msra.mxu0 %v319
    %358 = vmatpush.msra.mxu0 %v317
    %359 = vmatpush.msra.mxu0 %v315
    %360 = vmatpush.msra.mxu0 %v313
    %361 = vmatpush.msra.mxu0 %v311
    %362 = vmatpush.msra.mxu0 %v309
    %363 = vmatmul.f32.gmra.mxu0 %v80
    %v364 = vpop.f32.mrf.mxu0
    %v365 = vadd.f32 %v343, %v364
    %366 = vdwg.mxu0
    %367 = vmatpush.msra.mxu0 %v340
    %368 = vmatpush.msra.mxu0 %v338
    %369 = vmatpush.msra.mxu0 %v336
    %370 = vmatpush.msra.mxu0 %v334
    %371 = vmatpush.msra.mxu0 %v332
    %372 = vmatpush.msra.mxu0 %v330
    %373 = vmatpush.msra.mxu0 %v328
    %374 = vmatpush.msra.mxu0 %v326
    %375 = vmatpush.msra.mxu0 %v324
    %376 = vmatpush.msra.mxu0 %v322
    %377 = vmatpush.msra.mxu0 %v320
    %378 = vmatpush.msra.mxu0 %v318
    %379 = vmatpush.msra.mxu0 %v316
    %380 = vmatpush.msra.mxu0 %v314
    %381 = vmatpush.msra.mxu0 %v312
    %382 = vmatpush.msra.mxu0 %v310
    %383 = vmatmul.f32.gmra.mxu0 %v80
    %v384 = vpop.f32.mrf.mxu0
    %v385 = vadd.f32 %v344, %v384
    %386 = vdwg.mxu0
    %v387 = vadd.f32 %v365, %v385
    %388 = vadd.xlane.f32.xlu0 %v387
    %v389 = vpop.xlane.xlu0 %388
    %v390 = vmul.f32 %v389, 0.00390625
    %v391 = vsub.f32 %v365, %v390
    %v392 = vsub.f32 %v385, %v390
    %v393 = vmul.f32 %v391, %v391
    %v394 = vmul.f32 %v392, %v392
    %v395 = vadd.f32 %v393, %v394
    %396 = vadd.xlane.f32.xlu0 %v395
    %v397 = vpop.xlane.xlu0 %396
    %v398 = vmul.f32 %v397, 0.00390625
    %v399 = vadd.f32 %v398, 1e-05
    %v400 = vrsqrt.pop %v399
    %v401 = vmul.f32 %v400, %v399
    %v402 = vmul.f32 %v401, %v400
    %v403 = vmul.f32 0.5, %v402
    %v404 = vsub.f32 1.5, %v403
    %v405 = vmul.f32 %v400, %v404
    %vm406 = vweird.f32 %v399
    %vm407 = vweird.f32 %v400
    %vm408 = vmor %vm406, %vm407
    %v409 = vsel %vm408, %v400, %v405
    %v410 = vmul.f32 %v391, %v409
    %v411 = vmul.f32 %v392, %v409
    %v412 = vmul.f32 %v410, %v185
    %v413 = vmul.f32 %v411, %v186
    %v414 = vadd.f32 %v412, %v192
    %v415 = vadd.f32 %v413, %v193
    %416 = vst [vmem:[#allocation10 + $0x20] sm:$0xff] %v414
    %417 = vst [vmem:[#allocation10 + $0x28] sm:$0xff] %v415
    %v418 = vld [vmem:[#allocation5 + $0x30] sm:$0xff]
    %v419 = vld [vmem:[#allocation5 + $0x38] sm:$0xff]
    %v420 = vld [vmem:[#allocation5 + $0x70] sm:$0xff]
    %v421 = vld [vmem:[#allocation5 + $0x78] sm:$0xff]
    %v422 = vld [vmem:[#allocation5 + $0xb0] sm:$0xff]
    %v423 = vld [vmem:[#allocation5 + $0xb8] sm:$0xff]
    %v424 = vld [vmem:[#allocation5 + $0xf0] sm:$0xff]
    %v425 = vld [vmem:[#allocation5 + $0xf8] sm:$0xff]
    %v426 = vld [vmem:[#allocation5 + $0x130] sm:$0xff]
    %v427 = vld [vmem:[#allocation5 + $0x138] sm:$0xff]
    %v428 = vld [vmem:[#allocation5 + $0x170] sm:$0xff]
    %v429 = vld [vmem:[#allocation5 + $0x178] sm:$0xff]
    %v430 = vld [vmem:[#allocation5 + $0x1b0] sm:$0xff]
    %v431 = vld [vmem:[#allocation5 + $0x1b8] sm:$0xff]
    %v432 = vld [vmem:[#allocation5 + $0x1f0] sm:$0xff]
    %v433 = vld [vmem:[#allocation5 + $0x1f8] sm:$0xff]
    %v434 = vld [vmem:[#allocation5 + $0x230] sm:$0xff]
    %v435 = vld [vmem:[#allocation5 + $0x238] sm:$0xff]
    %v436 = vld [vmem:[#allocation5 + $0x270] sm:$0xff]
    %v437 = vld [vmem:[#allocation5 + $0x278] sm:$0xff]
    %v438 = vld [vmem:[#allocation5 + $0x2b0] sm:$0xff]
    %v439 = vld [vmem:[#allocation5 + $0x2b8] sm:$0xff]
    %v440 = vld [vmem:[#allocation5 + $0x2f0] sm:$0xff]
    %v441 = vld [vmem:[#allocation5 + $0x2f8] sm:$0xff]
    %v442 = vld [vmem:[#allocation5 + $0x330] sm:$0xff]
    %v443 = vld [vmem:[#allocation5 + $0x338] sm:$0xff]
    %v444 = vld [vmem:[#allocation5 + $0x370] sm:$0xff]
    %v445 = vld [vmem:[#allocation5 + $0x378] sm:$0xff]
    %v446 = vld [vmem:[#allocation5 + $0x3b0] sm:$0xff]
    %v447 = vld [vmem:[#allocation5 + $0x3b8] sm:$0xff]
    %v448 = vld [vmem:[#allocation5 + $0x3f0] sm:$0xff]
    %v449 = vld [vmem:[#allocation5 + $0x3f8] sm:$0xff]
    %v450 = vld [vmem:[#allocation7 + $0x6] sm:$0x3]
    %v452 = vperm.slane %v450, 0
    %v453 = vperm.slane %v450, 1
    %456 = vmatpush.msra.mxu0 %v448
    %457 = vmatpush.msra.mxu0 %v446
    %458 = vmatpush.msra.mxu0 %v444
    %459 = vmatpush.msra.mxu0 %v442
    %460 = vmatpush.msra.mxu0 %v440
    %461 = vmatpush.msra.mxu0 %v438
    %462 = vmatpush.msra.mxu0 %v436
    %463 = vmatpush.msra.mxu0 %v434
    %464 = vmatpush.msra.mxu0 %v432
    %465 = vmatpush.msra.mxu0 %v430
    %466 = vmatpush.msra.mxu0 %v428
    %467 = vmatpush.msra.mxu0 %v426
    %468 = vmatpush.msra.mxu0 %v424
    %469 = vmatpush.msra.mxu0 %v422
    %470 = vmatpush.msra.mxu0 %v420
    %471 = vmatpush.msra.mxu0 %v418
    %472 = vmatmul.f32.gmra.mxu0 %v80
    %v473 = vpop.f32.mrf.mxu0
    %v474 = vadd.f32 %v452, %v473
    %475 = vdwg.mxu0
    %476 = vmatpush.msra.mxu0 %v449
    %477 = vmatpush.msra.mxu0 %v447
    %478 = vmatpush.msra.mxu0 %v445
    %479 = vmatpush.msra.mxu0 %v443
    %480 = vmatpush.msra.mxu0 %v441
    %481 = vmatpush.msra.mxu0 %v439
    %482 = vmatpush.msra.mxu0 %v437
    %483 = vmatpush.msra.mxu0 %v435
    %484 = vmatpush.msra.mxu0 %v433
    %485 = vmatpush.msra.mxu0 %v431
    %486 = vmatpush.msra.mxu0 %v429
    %487 = vmatpush.msra.mxu0 %v427
    %488 = vmatpush.msra.mxu0 %v425
    %489 = vmatpush.msra.mxu0 %v423
    %490 = vmatpush.msra.mxu0 %v421
    %491 = vmatpush.msra.mxu0 %v419
    %492 = vmatmul.f32.gmra.mxu0 %v80
    %v493 = vpop.f32.mrf.mxu0
    %v494 = vadd.f32 %v453, %v493
    %495 = vdwg.mxu0
    %v496 = vadd.f32 %v474, %v494
    %497 = vadd.xlane.f32.xlu0 %v496
    %v498 = vpop.xlane.xlu0 %497
    %v499 = vmul.f32 %v498, 0.00390625
    %v500 = vsub.f32 %v474, %v499
    %v501 = vsub.f32 %v494, %v499
    %v502 = vmul.f32 %v500, %v500
    %v503 = vmul.f32 %v501, %v501
    %v504 = vadd.f32 %v502, %v503
    %505 = vadd.xlane.f32.xlu0 %v504
    %v506 = vpop.xlane.xlu0 %505
    %v507 = vmul.f32 %v506, 0.00390625
    %v508 = vadd.f32 %v507, 1e-05
    %v509 = vrsqrt.pop %v508
    %v510 = vmul.f32 %v509, %v508
    %v511 = vmul.f32 %v510, %v509
    %v512 = vmul.f32 0.5, %v511
    %v513 = vsub.f32 1.5, %v512
    %v514 = vmul.f32 %v509, %v513
    %vm515 = vweird.f32 %v508
    %vm516 = vweird.f32 %v509
    %vm517 = vmor %vm515, %vm516
    %v518 = vsel %vm517, %v509, %v514
    %v519 = vmul.f32 %v500, %v518
    %v520 = vmul.f32 %v501, %v518
    %v521 = vmul.f32 %v519, %v185
    %v522 = vmul.f32 %v520, %v186
    %v523 = vadd.f32 %v521, %v192
    %v524 = vadd.f32 %v522, %v193
    %525 = vst [vmem:[#allocation10 + $0x30] sm:$0xff] %v523
    %526 = vst [vmem:[#allocation10 + $0x38] sm:$0xff] %v524
    // Predicated region
    $region38: #{tpu_custom_call.1} parent=1 // pred_check
      _
    $region39: #{tpu_custom_call.1} parent=1 // pred_check_branch
      %528 = sbr.rel (0) target = $region41
    $region40: #{tpu_custom_call.1} parent=1 // pred_region
      %530 = vsyncadd [#allocation4], 0
      %s532 = sshll.u32 [#allocation10], 4
      %s533 = int_to_ptr.vmem [resolvable:$true] %s532
      %s534 = sshll.u32 %s5, 4
      %s535 = int_to_ptr.hbm [resolvable:$true] %s534
      %537 = dma.vmem_to_hbm [thread:$0]  %s533, 1024, %s535, [#allocation4]
    $region41: #{tpu_custom_call.1} parent=1 // pred_fallthru
      _
    // Predicated region
    $region42: #{tpu_custom_call.1} parent=1 // pred_check
      _
    $region43: #{tpu_custom_call.1} parent=1 // pred_check_branch
      %539 = sbr.rel (0) target = $region45
    $region44: #{tpu_custom_call.1} parent=1 // pred_region
      %541 = dma.done [#allocation4], 1024
    $region45: #{tpu_custom_call.1} parent=1 // pred_fallthru
      _
    %542 = vsyncpa [#allocation3], 1
    %543 = vsyncpa [#allocation6], 1
    %544 = vsyncpa [#allocation9], 1
    %545 = vsyncpa [#allocation4], 1

</llo_original>
